<compile_context>
chip_gen: v5e
topology: v5e:2x2
jax: 0.10.0
libtpu: 0.0.40
codegen_flags: <defaults>
</compile_context>

<pallas_src>
import functools

import jax
import jax.numpy as jnp
from jax.experimental import pallas as pl
from jax.experimental.pallas import tpu as pltpu

D_POSE = 225
D_TRANS = 3
_LANE = 128
# 256 x 8192 bf16 weight tile = 4 MiB. Triple-buffered that is 12 MiB of VMEM
# for the weight stream, comfortably inside the 32 MiB scoped budget requested
# below on every generation (physical VMEM: v5e/v6e 128 MiB, v7x 64 MiB).
_TN_CAP = 8192
_VMEM_LIMIT_BYTES = 32 * 1024 * 1024


def _round_up(x, m):
    return ((x + m - 1) // m) * m


def _ceil_div(a, b):
    return -(-a // b)


def _pick_col_tiling(d_out_128, cap=_TN_CAP):
    """Column tiling for the weight stream.

    Picks n_tiles / tn so that
      * a tile is never wider than `cap` lanes (keeps each DMA ~4 MiB),
      * there are >= 2 tiles whenever d_out allows it, so the 'parallel' grid
        axis can be split across the two v7x TensorCores,
      * tiles are evenly sized 128-multiples (no degenerate 128-wide fallback);
        d_out is padded up to n_tiles * tn and the pad sliced away afterwards.
    Returns (tn, d_out_pad, n_tiles).
    """
    n_tiles = max(_ceil_div(d_out_128, cap), 2 if d_out_128 >= 2 * _LANE else 1)
    tn = _round_up(_ceil_div(d_out_128, n_tiles), _LANE)
    return tn, tn * n_tiles, n_tiles


def _weight_block_spec(k_pad, tn, n_col_tiles):
    """Weight column-tile spec; triple-buffer the hot HBM stream when the grid
    is deep enough for a 3rd in-flight DMA to matter."""
    index_map = lambda j: (0, j)
    if n_col_tiles >= 3:
        try:
            return pl.BlockSpec((k_pad, tn), index_map, pipeline_mode=pl.Buffered(3))
        except TypeError:  # jax version without pipeline_mode on BlockSpec
            pass
    return pl.BlockSpec((k_pad, tn), index_map)


def _linear_kernel(x_ref, wt_ref, b_ref, o_ref):
    # x_ref : (B, K_pad)   bf16, full block (reused for every column tile)
    # wt_ref: (K_pad, TN)  bf16 weight column tile  -- the hot HBM stream
    # b_ref : (1, TN)      f32 bias tile
    # o_ref : (B, TN)      f32 output tile (lane-dense store)
    acc = jnp.dot(x_ref[...], wt_ref[...], preferred_element_type=jnp.float32)
    o_ref[...] = (acc + b_ref[...]).astype(o_ref.dtype)


def pack_linear_params(w_t, b, *, tn_cap=_TN_CAP):
    """Pad + cast the Linear parameters once for the weight-streaming kernel.

    w_t: (D_in, D_out) f32 (weight already stored transposed)
    b  : (D_out,)      f32
    Returns (w_packed bf16 (K_pad, D_out_pad), b_packed f32 (1, D_out_pad), tn).
    """
    d_in, d_out = w_t.shape
    k_pad = _round_up(d_in, _LANE)          # 238 -> 256: one full MXU pass deep
    d_out_128 = _round_up(d_out, _LANE)
    tn, d_out_pad, _ = _pick_col_tiling(d_out_128, tn_cap)
    # TODO(synk): optional int8 (v5e/v6e) or fp8-e4m3 (v7x, no int MXU) weight
    # stream with per-column scales would halve HBM traffic again; kept bf16
    # here for accuracy and to stay generation-agnostic.
    w_p = (
        jnp.zeros((k_pad, d_out_pad), jnp.bfloat16)
        .at[:d_in, :d_out].set(w_t.astype(jnp.bfloat16))
    )
    b_p = (
        jnp.zeros((1, d_out_pad), jnp.float32)
        .at[0, :d_out].set(b.astype(jnp.float32))
    )
    return w_p, b_p, tn


def pallas_linear(x, w_packed, b_packed, tn, d_out):
    """y = x @ W^T + b using pre-packed (padded, bf16) parameters."""
    B, d_in = x.shape
    k_pad, d_out_pad = w_packed.shape
    n_col_tiles = d_out_pad // tn

    # Pad the (tiny) activation to the aligned K; zero columns contribute zero.
    # Note: x is quantized to bf16 here (like the weights); the error bound in
    # __main__ covers bf16 quantization of both x and W.
    x_p = (
        jnp.zeros((B, k_pad), jnp.bfloat16)
        .at[:, :d_in].set(x.astype(jnp.bfloat16))
    )

    cost = pl.CostEstimate(
        flops=2 * B * k_pad * d_out_pad,
        transcendentals=0,
        bytes_accessed=(w_packed.size * 2          # bf16 weight stream (dominant)
                        + x_p.size * 2             # bf16 activations
                        + b_packed.size * 4        # f32 bias
                        + B * d_out_pad * 4),      # f32 output
    )

    y = pl.pallas_call(
        _linear_kernel,
        out_shape=jax.ShapeDtypeStruct((B, d_out_pad), jnp.float32),
        grid_spec=pltpu.PrefetchScalarGridSpec(
            num_scalar_prefetch=0,
            grid=(n_col_tiles,),
            in_specs=[
                pl.BlockSpec((B, k_pad), lambda j: (0, 0)),   # x: full, reused each tile
                _weight_block_spec(k_pad, tn, n_col_tiles),   # weight column tile (streamed)
                pl.BlockSpec((1, tn), lambda j: (0, j)),      # bias tile
            ],
            out_specs=pl.BlockSpec((B, tn), lambda j: (0, j)),
        ),
        compiler_params=pltpu.CompilerParams(
            # >= 2 independent column tiles -> both v7x TCs stream disjoint ranges.
            dimension_semantics=("parallel",),
            vmem_limit_bytes=_VMEM_LIMIT_BYTES,
        ),
        cost_estimate=cost,
    )(x_p, w_packed, b_packed)

    return y[:, :d_out]


def _forward_impl(betas, pose, trans, w_packed, b_packed, *, tn, d_out, n_vertices):
    # Glue (concat, pad, slice, reshape) lives under the same jit as the kernel.
    x = jnp.concatenate([betas, pose, trans], axis=-1)      # (B, n_betas + 228)
    y = pallas_linear(x, w_packed, b_packed, tn, d_out)
    return {"vertices": y.reshape(-1, n_vertices, 3)}


class MockBodyModelPallas:
    """JAX/Pallas port of MockBodyModel."""

    def __init__(self, n_vertices, batch_size=1, n_betas=10, key=None):
        self.n_vertices = n_vertices
        self.batch_size = batch_size
        self.n_betas = n_betas
        d_in = n_betas + D_POSE + D_TRANS
        d_out = n_vertices * 3
        self.d_out = d_out
        if key is None:
            key = jax.random.PRNGKey(0)
        kw, kb = jax.random.split(key)
        # Deterministic init mimicking torch.nn.Linear default (uniform(-1/sqrt(fan_in), ...)).
        bound = 1.0 / (d_in ** 0.5)
        # Master f32 params, weight stored pre-transposed as (D_in, D_out).
        self.w_t = jax.random.uniform(kw, (d_in, d_out), jnp.float32, -bound, bound)
        self.b = jax.random.uniform(kb, (d_out,), jnp.float32, -bound, bound)
        # Kernel-ready parameters: padded + bf16 weight stream, packed once at init.
        self.w_packed, self.b_packed, self.tn = pack_linear_params(self.w_t, self.b)
        # Whole forward jitted once: concat/pad/slice/reshape fuse with the kernel launch.
        self._forward = jax.jit(functools.partial(
            _forward_impl, tn=self.tn, d_out=self.d_out, n_vertices=self.n_vertices))

    def __call__(self, betas, pose, trans, *args, **kwargs):
        return self._forward(betas, pose, trans, self.w_packed, self.b_packed)


if __name__ == "__main__":
    batch = 2
    n_betas = 10
    n_vertices = 85   # n_vertices*3 = 255: deliberately NOT a multiple of 128

    key = jax.random.PRNGKey(0)
    k_model, k_betas, k_pose, k_trans = jax.random.split(key, 4)

    model = MockBodyModelPallas(n_vertices, n_betas=n_betas, key=k_model)

    betas = jax.random.normal(k_betas, (batch, n_betas), jnp.float32)
    pose = jax.random.normal(k_pose, (batch, D_POSE), jnp.float32)
    trans = jax.random.normal(k_trans, (batch, D_TRANS), jnp.float32)

    out = model(betas, pose, trans)
    vertices = jax.block_until_ready(out["vertices"])
    assert vertices.shape == (batch, n_vertices, 3)

    # Reference 1: same bf16 inputs/weights, f32 accumulation (should match kernel tightly).
    x = jnp.concatenate([betas, pose, trans], axis=-1)
    ref_bf16 = (
        jnp.dot(x.astype(jnp.bfloat16), model.w_t.astype(jnp.bfloat16),
                preferred_element_type=jnp.float32)
        + model.b
    ).reshape(-1, n_vertices, 3)
    assert jnp.allclose(vertices, ref_bf16, atol=2e-3, rtol=2e-3)

    # Reference 2: full-f32 math (loose bound; covers bf16 quantization of x and W).
    ref_f32 = (x @ model.w_t + model.b).reshape(-1, n_vertices, 3)
    assert jnp.allclose(vertices, ref_f32, atol=5e-2, rtol=5e-2)

    print("KERNEL_OK")
</pallas_src>

<mosaic_0001>
module attributes {stable_mosaic.version = 11 : i64} {
  func.func @_linear_kernel(%arg0: i32, %arg1: memref<2x256xbf16, #tpu.memory_space<vmem>>, %arg2: memref<256x128xbf16, #tpu.memory_space<vmem>>, %arg3: memref<1x128xf32, #tpu.memory_space<vmem>>, %arg4: memref<2x128xf32, #tpu.memory_space<vmem>>) attributes {dimension_semantics = [#tpu.dimension_semantics<parallel>], iteration_bounds = array<i64: 2>, scalar_prefetch = 0 : i64, scratch_operands = 0 : i64, tpu.core_type = #tpu.core_type<tc>, window_params = [{pipeline_mode = #tpu.pipeline_mode<synchronous>, transform_indices = @transform_0, window_bounds = array<i64: 2, 256>}, {transform_indices = @transform_1, window_bounds = array<i64: 256, 128>}, {transform_indices = @transform_2, window_bounds = array<i64: 1, 128>}, {transform_indices = @transform_3, window_bounds = array<i64: 2, 128>}]} {
    %c0 = arith.constant 0 : index
    %c0_0 = arith.constant 0 : index
    %0 = vector.load %arg1[%c0, %c0_0] : memref<2x256xbf16, #tpu.memory_space<vmem>>, vector<2x256xbf16>
    %c0_1 = arith.constant 0 : index
    %c0_2 = arith.constant 0 : index
    %1 = vector.load %arg2[%c0_1, %c0_2] : memref<256x128xbf16, #tpu.memory_space<vmem>>, vector<256x128xbf16>
    %cst = arith.constant dense<0.000000e+00> : vector<2x128xf32>
    %2 = tpu.matmul %0, %1, %cst {dimension_numbers = #tpu.dot_dimension_numbers<[1], [0], [0], [1], [0, 0, 1, 1], [], []>} : vector<2x256xbf16>, vector<256x128xbf16>, vector<2x128xf32> -> vector<2x128xf32>
    %c0_3 = arith.constant 0 : index
    %c0_4 = arith.constant 0 : index
    %3 = vector.load %arg3[%c0_3, %c0_4] : memref<1x128xf32, #tpu.memory_space<vmem>>, vector<1x128xf32>
    %4 = vector.broadcast %3 : vector<1x128xf32> to vector<2x128xf32>
    %5 = arith.addf %2, %4 : vector<2x128xf32>
    %c0_5 = arith.constant 0 : index
    %c0_6 = arith.constant 0 : index
    %6 = vector.load %arg4[%c0_5, %c0_6] : memref<2x128xf32, #tpu.memory_space<vmem>>, vector<2x128xf32>
    tpu.vector_store %arg4[%c0_5, %c0_6], %5 {strides = array<i32>} : memref<2x128xf32, #tpu.memory_space<vmem>>, vector<2x128xf32>,
    return
  }
  func.func @transform_0(%arg0: i32) -> (i32, i32) {
    %c0_i32 = arith.constant 0 : i32
    %c0_i32_0 = arith.constant 0 : i32
    %c0_i32_1 = arith.constant 0 : i32
    return %c0_i32, %c0_i32_0 : i32, i32
  }
  func.func @transform_1(%arg0: i32) -> (i32, i32) {
    %c0_i32 = arith.constant 0 : i32
    %c0_i32_0 = arith.constant 0 : i32
    return %c0_i32, %arg0 : i32, i32
  }
  func.func @transform_2(%arg0: i32) -> (i32, i32) {
    %c0_i32 = arith.constant 0 : i32
    %c0_i32_0 = arith.constant 0 : i32
    return %c0_i32, %arg0 : i32, i32
  }
  func.func @transform_3(%arg0: i32) -> (i32, i32) {
    %c0_i32 = arith.constant 0 : i32
    %c0_i32_0 = arith.constant 0 : i32
    return %c0_i32, %arg0 : i32, i32
  }
}

</mosaic_0001>

<llo_original>
// kernel: _forward_impl.1
$region0: #{_forward_impl.1}
  #allocation0 [shape = 'u32[]', space=smem, size = 0x4, offset = 0x4, fixed_abs, tag = 'smem constant byte address 0x4 - core index']
  #allocation1 [shape = 'u32[72,128]{1,0:T(1,128)}', space=vmem, size = 0x9000, scoped, tag = 'internal scratch']
  %s0 = inlined_call_operand.vmem [shape: bf16[2,256], index: 0, kind: input, shape index: {}]
  %s1 = inlined_call_operand.hbm [shape: bf16[256,256], index: 1, kind: input, shape index: {}]
  %s2 = inlined_call_operand.vmem [shape: f32[1,256], index: 2, kind: input, shape index: {}]
  %s3 = inlined_call_operand.vmem [shape: f32[2,256], index: 3, kind: output, shape index: {}]
  %s4 = sld [smem:[#allocation0]]
  $region49: #{_forward_impl.1} parent=0
    _
  %s6 = ssub.s32 1, %s4
  %s7 = scalar_select 0, %s6, %s4
  $region1: #{_forward_impl.1} parent=0
    #allocation2 [shape = 'u8[131072]{0}', space=vmem, size = 0x20000, scoped, tag = 'input window, operand 1']
    #allocation3 [shape = 's32[2]{0}', space=sflag, size = 0x8, scoped, tag = 'scoped memory for _forward_impl.1']
    %8 = vsyncpa [#allocation3], 0
    %s9 = scalar_lea.sflag [#allocation3], 1
    %10 = vsyncpa %s9, 0
    loop: start=0, step=1, limit=4
    $region2: #{_forward_impl.1} parent=1 // loop_pre_header
      _
    $region3: #{_forward_impl.1} parent=1 // loop_header
      %s12 = sphi 0, %s16
      %p13 = scmp.ge.s32.totalorder %s12, 4
      %s20 = sphi 0, %s20
      %s22 = sphi 0, %s20
      %s23 = sphi 0, %s22
      %s37 = sphi 0, %s23
      %s43 = sphi 0, %s45
      %s46 = sphi 0, %s43
      %s47 = sphi 0, %s46
      %s63 = sphi 0, %s47
      %s69 = sphi 0, %s71
      %s72 = sphi 0, %s69
      %s73 = sphi 0, %s72
      %s89 = sphi 0, %s73
      %s95 = sphi 0, %s97
      %s98 = sphi 0, %s95
      %s99 = sphi 0, %s98
      %s115 = sphi 0, %s99
    $region4: #{_forward_impl.1} parent=1 // loop_header_branch
      %15 = sbr.rel (%p13) target = $region8
    $region5: #{_forward_impl.1} parent=1 // loop_body
      %s17 = ssub.s32 %s12, 1
      %s18 = ssub.s32 %s12, 2
      %s19 = sadd.s32 %s12, 1
      %s21 = sadd.s32 %s20, 1
      %p24 = scmp.eq.s32.totalorder %s12, 1
      %p25 = scmp.ne.s32.totalorder %s20, %s22
      %p26 = scmp.eq.s32.totalorder %s12, 0
      %p27 = por %p25, %p26
      %p28 = scmp.ne.s32.totalorder %s20, %s22
      %p29 = scmp.eq.s32.totalorder %s17, 1
      %p30 = por %p28, %p29
      %p31 = scmp.ne.s32.totalorder %s22, %s23
      %p32 = scmp.eq.s32.totalorder %s17, 0
      %p33 = por %p31, %p32
      %p34 = scmp.ne.s32.totalorder %s22, %s23
      %p35 = scmp.eq.s32.totalorder %s18, 1
      %p36 = por %p34, %p35
      %p38 = scmp.ne.s32.totalorder %s23, %s37
      %p39 = scmp.eq.s32.totalorder %s18, 0
      %p40 = por %p38, %p39
      %s41 = ssub.s32 %s12, %s19
      %p42 = scmp.eq.s32.totalorder %s41, 0
      %s44 = sadd.s32 %s43, 1
      %s45 = scalar_select %p42, %s43, %s44
      %p48 = pneg %p42
      %p49 = scmp.eq.s32.totalorder %s12, 1
      %p50 = por %p48, %p49
      %p51 = scmp.ne.s32.totalorder %s43, %s46
      %p52 = scmp.eq.s32.totalorder %s12, 0
      %p53 = por %p51, %p52
      %p54 = scmp.ne.s32.totalorder %s43, %s46
      %p55 = scmp.eq.s32.totalorder %s17, 1
      %p56 = por %p54, %p55
      %p57 = scmp.ne.s32.totalorder %s46, %s47
      %p58 = scmp.eq.s32.totalorder %s17, 0
      %p59 = por %p57, %p58
      %p60 = scmp.ne.s32.totalorder %s46, %s47
      %p61 = scmp.eq.s32.totalorder %s18, 1
      %p62 = por %p60, %p61
      %p64 = scmp.ne.s32.totalorder %s47, %s63
      %p65 = scmp.eq.s32.totalorder %s18, 0
      %p66 = por %p64, %p65
      %s67 = ssub.s32 %s12, %s19
      %p68 = scmp.eq.s32.totalorder %s67, 0
      %s70 = sadd.s32 %s69, 1
      %s71 = scalar_select %p68, %s69, %s70
      %p74 = pneg %p68
      %p75 = scmp.eq.s32.totalorder %s12, 1
      %p76 = por %p74, %p75
      %p77 = scmp.ne.s32.totalorder %s69, %s72
      %p78 = scmp.eq.s32.totalorder %s12, 0
      %p79 = por %p77, %p78
      %p80 = scmp.ne.s32.totalorder %s69, %s72
      %p81 = scmp.eq.s32.totalorder %s17, 1
      %p82 = por %p80, %p81
      %p83 = scmp.ne.s32.totalorder %s72, %s73
      %p84 = scmp.eq.s32.totalorder %s17, 0
      %p85 = por %p83, %p84
      %p86 = scmp.ne.s32.totalorder %s72, %s73
      %p87 = scmp.eq.s32.totalorder %s18, 1
      %p88 = por %p86, %p87
      %p90 = scmp.ne.s32.totalorder %s73, %s89
      %p91 = scmp.eq.s32.totalorder %s18, 0
      %p92 = por %p90, %p91
      %s93 = ssub.s32 %s12, %s19
      %p94 = scmp.eq.s32.totalorder %s93, 0
      %s96 = sadd.s32 %s95, 1
      %s97 = scalar_select %p94, %s95, %s96
      %p100 = pneg %p94
      %p101 = scmp.eq.s32.totalorder %s12, 1
      %p102 = por %p100, %p101
      %p103 = scmp.ne.s32.totalorder %s95, %s98
      %p104 = scmp.eq.s32.totalorder %s12, 0
      %p105 = por %p103, %p104
      %p106 = scmp.ne.s32.totalorder %s95, %s98
      %p107 = scmp.eq.s32.totalorder %s17, 1
      %p108 = por %p106, %p107
      %p109 = scmp.ne.s32.totalorder %s98, %s99
      %p110 = scmp.eq.s32.totalorder %s17, 0
      %p111 = por %p109, %p110
      %p112 = scmp.ne.s32.totalorder %s98, %s99
      %p113 = scmp.eq.s32.totalorder %s18, 1
      %p114 = por %p112, %p113
      %p116 = scmp.ne.s32.totalorder %s99, %s115
      %p117 = scmp.eq.s32.totalorder %s18, 0
      %p118 = por %p116, %p117
      %p119 = scmp.le.s32.totalorder 1, %s12
      %p120 = scmp.lt.s32.totalorder %s12, 3
      %p121 = pnand %p119, %p120
      %p122 = pneg %p121
      // Predicated region
      $region9: #{_forward_impl.1} parent=5 // pred_check
        _
      $region10: #{_forward_impl.1} parent=5 // pred_check_branch
        %124 = sbr.rel (%p121) target = $region12
      $region11: #{_forward_impl.1} parent=5 // pred_region
        %s125 = ssub.s32 %s12, 1
        // Predicated region
        $region13: #{_forward_impl.1} parent=11 // pred_check
          %p126 = pneg %p33
        $region14: #{_forward_impl.1} parent=11 // pred_check_branch
          %128 = sbr.rel (%p126) target = $region16
        $region15: #{_forward_impl.1} parent=11 // pred_region
          _
        $region16: #{_forward_impl.1} parent=11 // pred_fallthru
          _
      $region12: #{_forward_impl.1} parent=5 // pred_fallthru
        _
      %p129 = scmp.lt.s32.totalorder %s12, 2
      // Predicated region
      $region17: #{_forward_impl.1} parent=5 // pred_check
        %p130 = pneg %p129
      $region18: #{_forward_impl.1} parent=5 // pred_check_branch
        %132 = sbr.rel (%p130) target = $region20
      $region19: #{_forward_impl.1} parent=5 // pred_region
        // Predicated region
        $region21: #{_forward_impl.1} parent=19 // pred_check
          %p133 = pneg %p53
        $region22: #{_forward_impl.1} parent=19 // pred_check_branch
          %135 = sbr.rel (%p133) target = $region24
        $region23: #{_forward_impl.1} parent=19 // pred_region
          %s136 = sand.u32 %s43, 1
          %s137 = scalar_lea.sflag [#allocation3], %s136
          %s138 = sand.u32 %s43, 1
          %s139 = smul.addr %s138, 128
          %s140 = scalar_lea.vmem [#allocation2], %s139
          %142 = vsyncadd %s137, 0
          %s143 = smul.addr %s12, 4
          %s144 = scalar_lea.hbm %s1, %s143
          %s145 = sshll.u32 %s144, 4
          %s146 = int_to_ptr.hbm [resolvable:$true] %s145
          %s147 = sshll.u32 %s140, 4
          %s148 = int_to_ptr.vmem [resolvable:$true] %s147
          %153 = dma.hbm_to_vmem [thread:$0]  %s146, 2048, %s148, %s137, 128, 64, 4
        $region24: #{_forward_impl.1} parent=19 // pred_fallthru
          _
        // Predicated region
        $region25: #{_forward_impl.1} parent=19 // pred_check
          %p154 = pneg %p79
        $region26: #{_forward_impl.1} parent=19 // pred_check_branch
          %156 = sbr.rel (%p154) target = $region28
        $region27: #{_forward_impl.1} parent=19 // pred_region
          %p157 = scmp.lt.s32.totalorder %s12, 1
          %s158 = scalar_select %p157, %s12, 1
          %s159 = scalar_lea.vmem %s2, %s158
        $region28: #{_forward_impl.1} parent=19 // pred_fallthru
          _
      $region20: #{_forward_impl.1} parent=5 // pred_fallthru
        _
      %p160 = scmp.le.s32.totalorder 1, %s12
      %p161 = scmp.lt.s32.totalorder %s12, 3
      %p162 = pnand %p160, %p161
      %p163 = pneg %p162
      // Predicated region
      $region29: #{_forward_impl.1} parent=5 // pred_check
        _
      $region30: #{_forward_impl.1} parent=5 // pred_check_branch
        %165 = sbr.rel (%p162) target = $region32
      $region31: #{_forward_impl.1} parent=5 // pred_region
        %s166 = ssub.s32 %s12, 1
        %s167 = sand.u32 %s46, 1
        %s168 = scalar_lea.sflag [#allocation3], %s167
        %s169 = sand.u32 %s46, 1
        %s170 = smul.addr %s169, 128
        %s171 = scalar_lea.vmem [#allocation2], %s170
        // Predicated region
        $region33: #{_forward_impl.1} parent=31 // pred_check
          %p172 = pneg %p59
        $region34: #{_forward_impl.1} parent=31 // pred_check_branch
          %174 = sbr.rel (%p172) target = $region36
        $region35: #{_forward_impl.1} parent=31 // pred_region
          %176 = dma.done %s168, 2048
        $region36: #{_forward_impl.1} parent=31 // pred_fallthru
          _
        %p177 = pneg %p33
        %p178 = pneg %p30
        %s179 = sand.u32 %s46, 1
        %s180 = scalar_lea.sflag [#allocation3], %s179
        %s181 = sand.u32 %s46, 1
        %s182 = smul.addr %s181, 128
        %s183 = scalar_lea.vmem [#allocation2], %s182
        %p184 = pneg %p59
        %p185 = pneg %p56
        %p186 = scmp.lt.s32.totalorder %s17, 1
        %s187 = scalar_select %p186, %s17, 1
        %s188 = scalar_lea.vmem %s2, %s187
        %p189 = pneg %p85
        %p190 = pneg %p82
        %p191 = pneg %p111
        %p192 = pneg %p108
        %p193 = scmp.lt.s32.totalorder %s17, 1
        %s194 = scalar_select %p193, %s17, 1
        %s195 = smul.addr %s194, 2
        %s196 = scalar_lea.vmem %s3, %s195
        %p197 = scmp.lt.s32.totalorder %s17, 1
        %s198 = scalar_select %p197, %s17, 1
        %s199 = scalar_lea.vmem %s2, %s198
        %p200 = scmp.lt.s32.totalorder %s17, 1
        %s201 = scalar_select %p200, %s17, 1
        %s202 = smul.addr %s201, 2
        %s203 = scalar_lea.vmem %s3, %s202
        %v204 = vld [vmem:[%s0] sm:$0x3]
        %v205 = vld [vmem:[%s171] sm:$0xf]
        %v206 = vld [vmem:[%s171 + $0x4] sm:$0xf]
        %v207 = vld [vmem:[%s171 + $0x8] sm:$0xf]
        %v208 = vld [vmem:[%s171 + $0xc] sm:$0xf]
        %v209 = vld [vmem:[%s171 + $0x10] sm:$0xf]
        %v210 = vld [vmem:[%s171 + $0x14] sm:$0xf]
        %v211 = vld [vmem:[%s171 + $0x18] sm:$0xf]
        %v212 = vld [vmem:[%s171 + $0x1c] sm:$0xf]
        %v213 = vld [vmem:[%s171 + $0x20] sm:$0xf]
        %v214 = vld [vmem:[%s171 + $0x24] sm:$0xf]
        %v215 = vld [vmem:[%s171 + $0x28] sm:$0xf]
        %v216 = vld [vmem:[%s171 + $0x2c] sm:$0xf]
        %v217 = vld [vmem:[%s171 + $0x30] sm:$0xf]
        %v218 = vld [vmem:[%s171 + $0x34] sm:$0xf]
        %v219 = vld [vmem:[%s171 + $0x38] sm:$0xf]
        %v220 = vld [vmem:[%s171 + $0x3c] sm:$0xf]
        %v221 = vld [vmem:[%s171 + $0x40] sm:$0xf]
        %v222 = vld [vmem:[%s171 + $0x44] sm:$0xf]
        %v223 = vld [vmem:[%s171 + $0x48] sm:$0xf]
        %v224 = vld [vmem:[%s171 + $0x4c] sm:$0xf]
        %v225 = vld [vmem:[%s171 + $0x50] sm:$0xf]
        %v226 = vld [vmem:[%s171 + $0x54] sm:$0xf]
        %v227 = vld [vmem:[%s171 + $0x58] sm:$0xf]
        %v228 = vld [vmem:[%s171 + $0x5c] sm:$0xf]
        %v229 = vld [vmem:[%s171 + $0x60] sm:$0xf]
        %v230 = vld [vmem:[%s171 + $0x64] sm:$0xf]
        %v231 = vld [vmem:[%s171 + $0x68] sm:$0xf]
        %v232 = vld [vmem:[%s171 + $0x6c] sm:$0xf]
        %v233 = vld [vmem:[%s171 + $0x70] sm:$0xf]
        %v234 = vld [vmem:[%s171 + $0x74] sm:$0xf]
        %v235 = vld [vmem:[%s171 + $0x78] sm:$0xf]
        %v236 = vld [vmem:[%s171 + $0x7c] sm:$0xf]
        %v237 = vld [vmem:[%s199] sm:$0x1]
        %v239 = vperm.slane %v237, 0
        %242 = vst [vmem:[#allocation1] ss:$9 sm:$0xff] %v204
        %v243 = vld [vmem:[#allocation1] sm:$0xff]
        %v244 = vld [vmem:[#allocation1 + $0x9] sm:$0xff]
        %v279 = vunpack.c.l.b16 %v205
        %v280 = vunpack.c.l.b16 %v206
        %v281 = vunpack.c.l.b16 %v207
        %v282 = vunpack.c.l.b16 %v208
        %v283 = vunpack.c.l.b16 %v209
        %v284 = vunpack.c.l.b16 %v210
        %v285 = vunpack.c.l.b16 %v211
        %v286 = vunpack.c.l.b16 %v212
        %v287 = vunpack.c.l.b16 %v213
        %v288 = vunpack.c.l.b16 %v214
        %v289 = vunpack.c.l.b16 %v215
        %v290 = vunpack.c.l.b16 %v216
        %v291 = vunpack.c.l.b16 %v217
        %v292 = vunpack.c.l.b16 %v218
        %v293 = vunpack.c.l.b16 %v219
        %v294 = vunpack.c.l.b16 %v220
        %v295 = vunpack.c.l.b16 %v221
        %v296 = vunpack.c.l.b16 %v222
        %v297 = vunpack.c.l.b16 %v223
        %v298 = vunpack.c.l.b16 %v224
        %v299 = vunpack.c.l.b16 %v225
        %v300 = vunpack.c.l.b16 %v226
        %v301 = vunpack.c.l.b16 %v227
        %v302 = vunpack.c.l.b16 %v228
        %v303 = vunpack.c.l.b16 %v229
        %v304 = vunpack.c.l.b16 %v230
        %v305 = vunpack.c.l.b16 %v231
        %v306 = vunpack.c.l.b16 %v232
        %v307 = vunpack.c.l.b16 %v233
        %v308 = vunpack.c.l.b16 %v234
        %v309 = vunpack.c.l.b16 %v235
        %v310 = vunpack.c.l.b16 %v236
        %v311 = vpack.c.b16 %v280, %v279
        %v312 = vpack.c.b16 %v282, %v281
        %v313 = vpack.c.b16 %v284, %v283
        %v314 = vpack.c.b16 %v286, %v285
        %v315 = vpack.c.b16 %v288, %v287
        %v316 = vpack.c.b16 %v290, %v289
        %v317 = vpack.c.b16 %v292, %v291
        %v318 = vpack.c.b16 %v294, %v293
        %v319 = vpack.c.b16 %v296, %v295
        %v320 = vpack.c.b16 %v298, %v297
        %v321 = vpack.c.b16 %v300, %v299
        %v322 = vpack.c.b16 %v302, %v301
        %v323 = vpack.c.b16 %v304, %v303
        %v324 = vpack.c.b16 %v306, %v305
        %v325 = vpack.c.b16 %v308, %v307
        %v326 = vpack.c.b16 %v310, %v309
        %343 = vmatpush.bf16.msra.mxu0 %v318
        %344 = vmatpush.bf16.msra.mxu0 %v317
        %345 = vmatpush.bf16.msra.mxu0 %v316
        %346 = vmatpush.bf16.msra.mxu0 %v315
        %347 = vmatpush.bf16.msra.mxu0 %v314
        %348 = vmatpush.bf16.msra.mxu0 %v313
        %349 = vmatpush.bf16.msra.mxu0 %v312
        %350 = vmatpush.bf16.msra.mxu0 %v311
        %351 = vmatmul.bf16.gmra.mxu0 %v243
        %v352 = vpop.f32.mrf.mxu0
        %v353 = vadd.f32 %v239, %v352
        %v354 = vpop.f32.mrf.mxu0
        %355 = vdwg.mxu0
        %356 = vmatpush.bf16.msra.mxu0 %v326
        %357 = vmatpush.bf16.msra.mxu0 %v325
        %358 = vmatpush.bf16.msra.mxu0 %v324
        %359 = vmatpush.bf16.msra.mxu0 %v323
        %360 = vmatpush.bf16.msra.mxu0 %v322
        %361 = vmatpush.bf16.msra.mxu0 %v321
        %362 = vmatpush.bf16.msra.mxu0 %v320
        %363 = vmatpush.bf16.msra.mxu0 %v319
        %364 = vmatmul.bf16.gmra.mxu0 %v244
        %v365 = vpop.f32.mrf.mxu0
        %v366 = vadd.f32 %v353, %v365
        %v367 = vpop.f32.mrf.mxu0
        %368 = vdwg.mxu0
        %369 = vst [vmem:[%s203] sm:$0x3] %v366
        %p370 = scmp.lt.s32.totalorder %s17, 1
        %s371 = scalar_select %p370, %s17, 1
        %s372 = smul.addr %s371, 2
        %s373 = scalar_lea.vmem %s3, %s372
        // Predicated region
        $region37: #{_forward_impl.1} parent=31 // pred_check
          %p374 = pneg %p108
        $region38: #{_forward_impl.1} parent=31 // pred_check_branch
          %376 = sbr.rel (%p374) target = $region40
        $region39: #{_forward_impl.1} parent=31 // pred_region
          _
        $region40: #{_forward_impl.1} parent=31 // pred_fallthru
          _
      $region32: #{_forward_impl.1} parent=5 // pred_fallthru
        _
      %p377 = scmp.le.s32.totalorder 2, %s12
      // Predicated region
      $region41: #{_forward_impl.1} parent=5 // pred_check
        %p378 = pneg %p377
      $region42: #{_forward_impl.1} parent=5 // pred_check_branch
        %380 = sbr.rel (%p378) target = $region44
      $region43: #{_forward_impl.1} parent=5 // pred_region
        %s381 = ssub.s32 %s12, 2
        // Predicated region
        $region45: #{_forward_impl.1} parent=43 // pred_check
          %p382 = pneg %p114
        $region46: #{_forward_impl.1} parent=43 // pred_check_branch
          %384 = sbr.rel (%p382) target = $region48
        $region47: #{_forward_impl.1} parent=43 // pred_region
          %p385 = scmp.lt.s32.totalorder %s18, 1
          %s386 = scalar_select %p385, %s18, 1
          %s387 = smul.addr %s386, 2
          %s388 = scalar_lea.vmem %s3, %s387
        $region48: #{_forward_impl.1} parent=43 // pred_fallthru
          _
      $region44: #{_forward_impl.1} parent=5 // pred_fallthru
        _
    $region6: #{_forward_impl.1} parent=1 // loop_footer
      %s16 = sadd.s32 1, %s12
    $region7: #{_forward_impl.1} parent=1 // loop_footer_branch
      %11 = sbr.rel target = $region3
    $region8: #{_forward_impl.1} parent=1 // loop_exit
      _
    %389 = vsyncpa [#allocation3], 1
    %s390 = scalar_lea.sflag [#allocation3], 1
    %391 = vsyncpa %s390, 1

</llo_original>
